<compile_context>
chip_gen: v7x
topology: tpu7x:2x2x1
jax: 0.10.0
libtpu: 0.0.40
codegen_flags: <defaults>
</compile_context>

<pallas_src>
import jax
import jax.numpy as jnp
from jax import lax
from jax.experimental import pallas as pl
from jax.experimental.pallas import tpu as pltpu


def _make_sum_kernel(seq_len, ts, need_mask):
    """Kernel: per-batch-tile running sum over the sequence axis."""

    def kernel(x_ref, o_ref, acc_ref):
        j = pl.program_id(1)                      # sequence-chunk index (reduction axis)

        @pl.when(j == 0)
        def _init():
            acc_ref[...] = jnp.zeros_like(acc_ref)

        xb = x_ref[...]                           # (bt, ts, H), input dtype
        if need_mask:
            # Ragged final sequence chunk: zero rows past seq_len so they do
            # not pollute the accumulator of valid batch rows.
            row = j * ts + lax.broadcasted_iota(jnp.int32, (1, ts, 1), 1)
            xb = jnp.where(row < seq_len, xb, 0)

        # f32 accumulation without materializing an explicit f32 copy of xb.
        acc_ref[...] += jnp.sum(xb, axis=1, dtype=jnp.float32)

        @pl.when(j == pl.num_programs(1) - 1)
        def _finalize():
            # attention == softmax over a size-1 axis == 1.0 exactly (and eval
            # dropout is identity), so attention^T @ x is just the sum over S.
            o_ref[...] = acc_ref[...].astype(o_ref.dtype)

    return kernel


def _additive_attention_fwd(x):
    B, S, H = x.shape
    dt = x.dtype
    itemsize = dt.itemsize
    sub = max(8, 32 // itemsize)                  # sublane tile: 8 f32, 16 bf16, 32 int8

    # ---- generation-aware VMEM budget (v5e/v6e: 128 MiB, v7x: 64 MiB/TC) ----
    try:
        vmem_cap = int(getattr(pltpu.get_tpu_info(), "vmem_capacity_bytes",
                               64 * 2 ** 20))
    except Exception:
        vmem_cap = 64 * 2 ** 20                   # conservative fallback
    vmem_limit = int(max(32 * 2 ** 20, min(vmem_cap - 8 * 2 ** 20, 100 * 2 ** 20)))
    budget = max(4 * 2 ** 20, vmem_limit - 8 * 2 ** 20)

    # ---- pick batch tile bt and sequence tile ts: biggest that fits VMEM ----
    # footprint(bt, ts) = 2*bt*ts*H (x, double-buffered) + bt*ts*H*4 (f32 temp)
    #                   + 2*bt*H (out, double-buffered)  + bt*H*4   (accumulator)
    ts = S
    row_bytes = S * H * (2 * itemsize + 4) + H * (4 + 2 * itemsize)
    bt_cap = budget // row_bytes
    if bt_cap >= B:
        bt = B
    elif bt_cap >= sub:
        bt = int((bt_cap // sub) * sub)
    else:
        # Even one sublane-aligned batch tile with the full sequence overflows
        # the budget -> also tile the sequence axis (inner "arbitrary" grid dim).
        bt = B if B <= sub else sub
        srow_bytes = bt * H * (2 * itemsize + 4)
        fixed = bt * H * (4 + 2 * itemsize)
        ts_cap = max(1, (budget - fixed) // srow_bytes)
        ts = int(min(S, max(sub, (ts_cap // sub) * sub)))

    # v7x megacore: prefer >= 2 parallel batch blocks when the batch allows it.
    if bt >= B and B >= 2 * sub:
        bt = ((-(-B // 2) + sub - 1) // sub) * sub

    nb = pl.cdiv(B, bt)
    ns = pl.cdiv(S, ts)
    b_out = nb * bt                               # output may have a ragged tail
    need_mask = (S % ts) != 0

    out = pl.pallas_call(
        _make_sum_kernel(S, ts, need_mask),
        out_shape=jax.ShapeDtypeStruct((b_out, H), dt),
        grid_spec=pltpu.PrefetchScalarGridSpec(
            num_scalar_prefetch=0,
            grid=(nb, ns),                        # reduction axis last
            in_specs=[
                # Full (S, H) trailing dims when they fit (no HBM padding of x).
                pl.BlockSpec((bt, ts, H), lambda i, j: (i, j, 0)),
            ],
            out_specs=pl.BlockSpec((bt, H), lambda i, j: (i, 0)),
            scratch_shapes=[pltpu.VMEM((bt, H), jnp.float32)],
        ),
        compiler_params=pltpu.CompilerParams(
            dimension_semantics=("parallel", "arbitrary"),
            vmem_limit_bytes=vmem_limit),
    )(x)

    if b_out != B:
        out = out[:B]
    return out.reshape(B, 1, H)


def additive_attention(x, wq, bq, wk, bk, wv, bv):
    """AdditiveAttention forward (eval mode).

    x: (B, S, H). Weights in PyTorch convention: wq/wk (H, H), wv (1, H), bv (1,).
    The projections only feed a softmax over a size-1 axis (== 1.0 exactly), so
    they cannot influence the output; they are accepted for API parity only.
    """
    del wq, bq, wk, bk, wv, bv                    # mathematically dead path (see docstring)
    # TODO(synk): training-mode dropout on the attention weights not implemented.
    return _additive_attention_fwd(x)


def additive_attention_ref(x, wq, bq, wk, bk, wv, bv):
    """Pure-JAX reference that runs the full (literal) projection path."""
    q = x @ wq.T + bq
    k = x @ wk.T + bk
    scores = jnp.tanh(q + k) @ wv.T + bv
    attn = jax.nn.softmax(scores, axis=-1)
    return jnp.einsum("bsk,bsh->bkh", attn, x)


if __name__ == "__main__":
    def run_case(case_idx, B, S, H):
        key = jax.random.fold_in(jax.random.PRNGKey(0), case_idx)
        kx, k1, k2, k3, k4, k5, k6 = jax.random.split(key, 7)

        x = jax.random.normal(kx, (B, S, H), dtype=jnp.float32)

        # deterministic PyTorch-Linear-style init: U(-1/sqrt(fan_in), 1/sqrt(fan_in))
        bound = 1.0 / jnp.sqrt(jnp.float32(H))
        wq = jax.random.uniform(k1, (H, H), minval=-bound, maxval=bound, dtype=jnp.float32)
        bq = jax.random.uniform(k2, (H,), minval=-bound, maxval=bound, dtype=jnp.float32)
        wk = jax.random.uniform(k3, (H, H), minval=-bound, maxval=bound, dtype=jnp.float32)
        bk = jax.random.uniform(k4, (H,), minval=-bound, maxval=bound, dtype=jnp.float32)
        wv = jax.random.uniform(k5, (1, H), minval=-bound, maxval=bound, dtype=jnp.float32)
        bv = jax.random.uniform(k6, (1,), minval=-bound, maxval=bound, dtype=jnp.float32)

        out = jax.block_until_ready(additive_attention(x, wq, bq, wk, bk, wv, bv))
        ref = additive_attention_ref(x, wq, bq, wk, bk, wv, bv)
        assert out.shape == (B, 1, H), out.shape
        assert jnp.allclose(out, ref, atol=1e-5, rtol=1e-5), "mismatch vs JAX reference"

    run_case(0, 2, 8, 32)      # module-default small shape (single block)
    run_case(1, 32, 16, 128)   # multi-block path (2 parallel batch tiles)
    print("KERNEL_OK")
</pallas_src>

<mosaic_0001>
module attributes {stable_mosaic.version = 11 : i64} {
  func.func @kernel(%arg0: i32, %arg1: i32, %arg2: memref<2x8x32xf32, #tpu.memory_space<vmem>>, %arg3: memref<2x32xf32, #tpu.memory_space<vmem>>, %arg4: memref<2x32xf32, #tpu.memory_space<vmem>>) attributes {dimension_semantics = [#tpu.dimension_semantics<parallel>, #tpu.dimension_semantics<arbitrary>], iteration_bounds = array<i64: 1, 1>, scalar_prefetch = 0 : i64, scratch_operands = 1 : i64, tpu.core_type = #tpu.core_type<tc>, window_params = [{transform_indices = @transform_0, window_bounds = array<i64: 2, 8, 32>}, {transform_indices = @transform_1, window_bounds = array<i64: 2, 32>}]} {
    %c0_i32 = arith.constant 0 : i32
    %0 = arith.cmpi eq, %arg1, %c0_i32 : i32
    %1 = arith.extui %0 : i1 to i32
    %c0_i32_0 = arith.constant 0 : i32
    %2 = arith.cmpi ne, %1, %c0_i32_0 : i32
    scf.if %2 {
      %cst_9 = arith.constant 0.000000e+00 : f32
      %11 = vector.broadcast %cst_9 : f32 to vector<2x32xf32>
      %c0_10 = arith.constant 0 : index
      %c0_11 = arith.constant 0 : index
      %12 = vector.load %arg4[%c0_10, %c0_11] : memref<2x32xf32, #tpu.memory_space<vmem>>, vector<2x32xf32>
      tpu.vector_store %arg4[%c0_10, %c0_11], %11 {strides = array<i32>} : memref<2x32xf32, #tpu.memory_space<vmem>>, vector<2x32xf32>,
    } else {
    }
    %c0 = arith.constant 0 : index
    %c0_1 = arith.constant 0 : index
    %c0_2 = arith.constant 0 : index
    %3 = vector.load %arg2[%c0, %c0_1, %c0_2] : memref<2x8x32xf32, #tpu.memory_space<vmem>>, vector<2x8x32xf32>
    %c0_3 = arith.constant 0 : index
    %c0_4 = arith.constant 0 : index
    %4 = vector.load %arg4[%c0_3, %c0_4] : memref<2x32xf32, #tpu.memory_space<vmem>>, vector<2x32xf32>
    %cst = arith.constant dense<0.000000e+00> : vector<2x32xf32>
    %5 = vector.multi_reduction <add>, %3, %cst [1] : vector<2x8x32xf32> to vector<2x32xf32>
    %6 = arith.addf %4, %5 : vector<2x32xf32>
    %c0_5 = arith.constant 0 : index
    %c0_6 = arith.constant 0 : index
    %7 = vector.load %arg4[%c0_5, %c0_6] : memref<2x32xf32, #tpu.memory_space<vmem>>, vector<2x32xf32>
    tpu.vector_store %arg4[%c0_5, %c0_6], %6 {strides = array<i32>} : memref<2x32xf32, #tpu.memory_space<vmem>>, vector<2x32xf32>,
    %c0_i32_7 = arith.constant 0 : i32
    %8 = arith.cmpi eq, %arg1, %c0_i32_7 : i32
    %9 = arith.extui %8 : i1 to i32
    %c0_i32_8 = arith.constant 0 : i32
    %10 = arith.cmpi ne, %9, %c0_i32_8 : i32
    scf.if %10 {
      %c0_9 = arith.constant 0 : index
      %c0_10 = arith.constant 0 : index
      %11 = vector.load %arg4[%c0_9, %c0_10] : memref<2x32xf32, #tpu.memory_space<vmem>>, vector<2x32xf32>
      %c0_11 = arith.constant 0 : index
      %c0_12 = arith.constant 0 : index
      %12 = vector.load %arg3[%c0_11, %c0_12] : memref<2x32xf32, #tpu.memory_space<vmem>>, vector<2x32xf32>
      tpu.vector_store %arg3[%c0_11, %c0_12], %11 {strides = array<i32>} : memref<2x32xf32, #tpu.memory_space<vmem>>, vector<2x32xf32>,
    } else {
    }
    return
  }
  func.func @transform_0(%arg0: i32, %arg1: i32) -> (i32, i32, i32) {
    %c0_i32 = arith.constant 0 : i32
    %c0_i32_0 = arith.constant 0 : i32
    return %arg0, %arg1, %c0_i32 : i32, i32, i32
  }
  func.func @transform_1(%arg0: i32, %arg1: i32) -> (i32, i32) {
    %c0_i32 = arith.constant 0 : i32
    %c0_i32_0 = arith.constant 0 : i32
    return %arg0, %c0_i32 : i32, i32
  }
}

</mosaic_0001>

<llo_original>
// kernel: tpu_custom_call.1
$region0: #{tpu_custom_call.1}
  #allocation0 [shape = 'u32[]', space=smem, size = 0x4, offset = 0x4, fixed_abs, tag = 'smem constant byte address 0x4 - core index']
  #allocation1 [shape = 'u32[144,128]{1,0:T(1,128)}', space=vmem, size = 0x12000, scoped, tag = 'internal scratch']
  #allocation2 [shape = 'f32[2,32]{1,0:T(2,128)}', space=vmem, size = 0x400, scoped, tag = 'scratch operand']
  %s0 = inlined_call_operand.hbm [shape: f32[2,8,32], index: 0, kind: input, shape index: {}]
  %s1 = inlined_call_operand.hbm [shape: f32[2,32], index: 1, kind: output, shape index: {}]
  %s2 = sld [smem:[#allocation0]]
  $region26: #{tpu_custom_call.1} parent=0
    _
  %s4 = ssub.s32 1, %s2
  %s5 = scalar_select 0, %s4, %s2
  $region1: #{tpu_custom_call.1} parent=0
    #allocation3 [shape = 'u8[8192]{0}', space=vmem, size = 0x2000, scoped, tag = 'input window, operand 0, single buffered']
    #allocation4 [shape = 's32[1]{0}', space=sflag, size = 0x4, scoped, tag = 'scoped memory for tpu_custom_call.1']
    #allocation5 [shape = 's32[1]{0}', space=sflag, size = 0x4, scoped, tag = 'scoped memory for tpu_custom_call.1']
    #allocation6 [shape = 'u8[1024]{0}', space=vmem, size = 0x400, scoped, tag = 'output window, operand 0, single buffered']
    %6 = vsyncpa [#allocation4], 0
    %7 = vsyncpa [#allocation5], 0
    // Predicated region
    $region2: #{tpu_custom_call.1} parent=1 // pred_check
      _
    $region3: #{tpu_custom_call.1} parent=1 // pred_check_branch
      %9 = sbr.rel (0) target = $region5
    $region4: #{tpu_custom_call.1} parent=1 // pred_region
      %s11 = ssub.s32 256, 256
      %12 = vsyncadd [#allocation4], %s11
      %s13 = sshll.u32 [#allocation3], 4
      %s14 = int_to_ptr.vmem [resolvable:$true] %s13
      %19 = dma.hbm_to_vmem [thread:$0]  %s0, 256, %s14, [#allocation4], 128, 128, 8
    $region5: #{tpu_custom_call.1} parent=1 // pred_fallthru
      _
    // Predicated region
    $region6: #{tpu_custom_call.1} parent=1 // pred_check
      _
    $region7: #{tpu_custom_call.1} parent=1 // pred_check_branch
      %21 = sbr.rel (0) target = $region9
    $region8: #{tpu_custom_call.1} parent=1 // pred_region
      %22 = dma.done [#allocation4], 256
    $region9: #{tpu_custom_call.1} parent=1 // pred_fallthru
      _
    %p23 = scmp.eq.s32.totalorder 0, 0
    // Predicated region
    $region10: #{tpu_custom_call.1} parent=1 // pred_check
      %p24 = pneg %p23
    $region11: #{tpu_custom_call.1} parent=1 // pred_check_branch
      %26 = sbr.rel (%p24) target = $region13
    $region12: #{tpu_custom_call.1} parent=1 // pred_region
      %vm27 = vcmask 254976
      %28 = vst.msk [vmem:[#allocation2] sm:$0x3] %vm27, 0.0
    $region13: #{tpu_custom_call.1} parent=1 // pred_fallthru
      _
    %v29 = vld [vmem:[#allocation3] sm:$0xff]
    %v30 = vld [vmem:[#allocation3 + $0x8] sm:$0xff]
    %v31 = vld [vmem:[#allocation2] sm:$0x3]
    %vm32 = vcmask 261120
    %v33 = vsel %vm32, %v29, 0.0
    %v34 = vrot.slane %v33, 4
    %v35 = vadd.f32 %v33, %v34
    %v36 = vrot.slane %v35, 2
    %v37 = vadd.f32 %v35, %v36
    %v38 = vrot.slane %v37, 1
    %v39 = vadd.f32 %v37, %v38
    %v40 = vsel %vm32, %v30, 0.0
    %v41 = vrot.slane %v40, 4
    %v42 = vadd.f32 %v40, %v41
    %v43 = vrot.slane %v42, 2
    %v44 = vadd.f32 %v42, %v43
    %v45 = vrot.slane %v44, 1
    %v46 = vadd.f32 %v44, %v45
    %vm49 = vcmask 1041409
    %v50 = vsel %vm49, %v46, %v39
    %v52 = vadd.f32 %v31, %v50
    %vm53 = vcmask 254976
    %54 = vst.msk [vmem:[#allocation2] sm:$0x3] %vm53, %v52
    // Predicated region
    $region14: #{tpu_custom_call.1} parent=1 // pred_check
      %p55 = pneg %p23
    $region15: #{tpu_custom_call.1} parent=1 // pred_check_branch
      %57 = sbr.rel (%p55) target = $region17
    $region16: #{tpu_custom_call.1} parent=1 // pred_region
      %v58 = vld [vmem:[#allocation2] sm:$0x3]
      %59 = vst.msk [vmem:[#allocation6] sm:$0x3] %vm53, %v58
    $region17: #{tpu_custom_call.1} parent=1 // pred_fallthru
      _
    // Predicated region
    $region18: #{tpu_custom_call.1} parent=1 // pred_check
      _
    $region19: #{tpu_custom_call.1} parent=1 // pred_check_branch
      %61 = sbr.rel (0) target = $region21
    $region20: #{tpu_custom_call.1} parent=1 // pred_region
      %s63 = ssub.s32 32, 32
      %64 = vsyncadd [#allocation5], %s63
      %s66 = sshll.u32 [#allocation6], 4
      %s67 = int_to_ptr.vmem [resolvable:$true] %s66
      %69 = dma.vmem_to_hbm [thread:$0]  %s67, 32, %s1, [#allocation5]
    $region21: #{tpu_custom_call.1} parent=1 // pred_fallthru
      _
    // Predicated region
    $region22: #{tpu_custom_call.1} parent=1 // pred_check
      _
    $region23: #{tpu_custom_call.1} parent=1 // pred_check_branch
      %71 = sbr.rel (0) target = $region25
    $region24: #{tpu_custom_call.1} parent=1 // pred_region
      %72 = dma.done [#allocation5], 32
    $region25: #{tpu_custom_call.1} parent=1 // pred_fallthru
      _
    %73 = vsyncpa [#allocation4], 1
    %74 = vsyncpa [#allocation5], 1

</llo_original>
